<compile_context>
chip_gen: v6e
topology: v6e:2x2x1
jax: 0.10.0
libtpu: 0.0.40
codegen_flags: <defaults>
</compile_context>

<pallas_src>
import functools

import jax
import jax.numpy as jnp
from jax import lax
from jax.experimental import pallas as pl
from jax.experimental.pallas import tpu as pltpu

LANE = 128        # TPU lane width; last dim of every block.
TILE_R = 4096     # rows per grid step: (4096, 128) f32 = 2 MiB per input block.
CHUNK_R = 512     # rows per in-kernel strip-mine step (~256 KiB f32 temporaries).
MAX_SHARDS = 2    # leading "parallel" grid axis (v7x has 2 TensorCores/chip).


def _num_tensorcores():
    """Best-effort TensorCore count (2 on v7x, else 1).  Falls back to
    MAX_SHARDS: on 1-TC chips the extra shard costs at most one redundant,
    compute-skipped block DMA per call, so the fallback is cheap."""
    try:
        info = pltpu.get_tpu_info()
        for name in ("num_cores", "core_count", "num_tensorcores"):
            v = getattr(info, name, None)
            if v is None:
                continue
            try:
                v = int(v)
            except (TypeError, ValueError):
                continue
            if v >= 1:
                return max(1, min(MAX_SHARDS, v))
    except Exception:
        pass
    return MAX_SHARDS


def _dice_bce_kernel(x_ref, t_ref, out_ref, *, tile_r, chunk_r, num_blocks,
                     first_masked, full_rows, rem_lanes):
    c = pl.program_id(0)                    # shard (parallel axis)
    j = pl.program_id(1)                    # row-block within shard (reduction)
    blocks_per_shard = pl.num_programs(1)
    rb = c * blocks_per_shard + j           # unclamped global row-block index

    # Zero this shard's resident accumulator at the start of its sweep.
    @pl.when(j == 0)
    def _():
        out_ref[...] = jnp.zeros_like(out_ref)

    nchunks = tile_r // chunk_r

    def fold(v):
        # (chunk_r, 128) -> (8, 128) with pure vreg-aligned VPU adds (the groups
        # are whole (8, 128) vreg tiles, so the reshape is layout-free).
        return v.reshape(-1, 8, LANE).sum(axis=0)

    def accumulate(masked):
        def process(start_row):
            x = x_ref[pl.ds(start_row, chunk_r), :].astype(jnp.float32)
            t = t_ref[pl.ds(start_row, chunk_r), :].astype(jnp.float32)

            # Shared-exp stable math (one EUP exp + one EUP log1p + one EUP
            # approx reciprocal per element; no f32 divide / Newton step):
            #   e   = exp(-|x|)
            #   p   = sigmoid(x) = where(x >= 0, 1, e) / (1 + e)
            #   lse = log1p(e)   = softplus(x) - max(x, 0)
            #   bce = softplus(x) - x*t = max(x, 0) - x*t + lse   (logits form)
            e = jnp.exp(-jnp.abs(x))
            r = pl.reciprocal(1.0 + e, approx=True)
            p = jnp.where(x >= 0.0, r, e * r)
            lse = jnp.log1p(e)
            bce = jnp.maximum(x, 0.0) - x * t + lse
            # torch.binary_cross_entropy clamps log terms at -100; for binary
            # targets that is exactly a 100-cap on the per-element loss (for
            # fractional targets it only differs when |logit| > ~100).
            bce = jnp.minimum(bce, 100.0)

            pt = p * t
            p_plus_t = p + t                # dice only needs sum(p) + sum(t)

            if masked:
                # Valid-element mask from the *unclamped* block index: zeroes
                # the ragged row/lane tail, wrapper zero-padding, Pallas
                # garbage-padding of the partial last block, and clamped-DMA
                # re-reads on over-range steps.  Row-level compares only, so no
                # int32 overflow for huge n.
                row0 = rb * tile_r + start_row
                r_idx = lax.broadcasted_iota(jnp.int32, (chunk_r, LANE), 0)
                row_g = row0 + r_idx
                valid = row_g < full_rows
                if rem_lanes:
                    l_idx = lax.broadcasted_iota(jnp.int32, (chunk_r, LANE), 1)
                    valid = valid | ((row_g == full_rows) & (l_idx < rem_lanes))
                pt = jnp.where(valid, pt, 0.0)
                p_plus_t = jnp.where(valid, p_plus_t, 0.0)
                bce = jnp.where(valid, bce, 0.0)

            out_ref[0, 0] += fold(pt)         # intersection: sum(p * t)
            out_ref[0, 1] += fold(p_plus_t)   # sum(p) + sum(t)
            out_ref[0, 2] += fold(bce)        # sum of per-element BCE

        if nchunks == 1:
            process(0)
        else:
            @pl.loop(0, nchunks)
            def _(s):
                process(pl.multiple_of(s * chunk_r, chunk_r))

    # Interior blocks: unmasked fast path (no iota / compares / selects).
    if first_masked > 0:
        @pl.when(rb < first_masked)
        def _():
            accumulate(masked=False)

    # Tail block: masked path.  Fully over-range blocks (rb >= num_blocks, from
    # shard-count padding of the grid) contribute nothing and skip all compute.
    if first_masked < num_blocks:
        @pl.when(jnp.logical_and(rb >= first_masked, rb < num_blocks))
        def _():
            accumulate(masked=True)


def dice_bce_loss(inputs, targets, smooth=1.0):
    """Pallas TPU implementation of DiceBCELoss.forward.  `inputs` are
    pre-sigmoid logits (sigmoid is applied in-kernel, as in the torch module)."""
    assert inputs.shape == targets.shape
    n = int(inputs.size)

    x = inputs.reshape(-1)
    t = targets.reshape(-1)

    # Lane/row padding.  For the common NCHW case n % 128 == 0 and rows is
    # large, so this is a zero-copy reshape.  TODO(synk): for n % 128 != 0 the
    # jnp.pad below rewrites the flattened array once in HBM; a manual
    # last-block DMA would avoid even that (rare path, left simple).
    lane_pad = (-n) % LANE
    rows = (n + lane_pad) // LANE
    if rows < CHUNK_R:
        # Tiny input: one block, one chunk; round rows up to a multiple of 8 so
        # the in-kernel fold stays vreg-aligned (pads a few KiB at most).
        row_pad = (-rows) % 8
        rows += row_pad
        tile_r = rows
        chunk_r = rows
    else:
        row_pad = 0
        tile_r = min(TILE_R, (rows // CHUNK_R) * CHUNK_R)
        chunk_r = CHUNK_R
    total_pad = lane_pad + row_pad * LANE
    if total_pad:
        x = jnp.pad(x, (0, total_pad))
        t = jnp.pad(t, (0, total_pad))
    x2 = x.reshape(rows, LANE)
    t2 = t.reshape(rows, LANE)

    num_blocks = pl.cdiv(rows, tile_r)
    num_shards = max(1, min(_num_tensorcores(), num_blocks))
    blocks_per_shard = pl.cdiv(num_blocks, num_shards)
    grid = (num_shards, blocks_per_shard)

    # The last block needs in-kernel masking iff it covers any element >= n
    # (ragged rows, lane tail, or wrapper padding).
    last_needs_mask = num_blocks * tile_r * LANE != n
    first_masked = num_blocks - 1 if last_needs_mask else num_blocks

    def in_map(c, j):
        # Clamp so every DMA lands on a real block; over-range grid steps are
        # skipped inside the kernel (which uses the unclamped index).
        return (jnp.minimum(c * blocks_per_shard + j, num_blocks - 1), 0)

    kernel = functools.partial(
        _dice_bce_kernel,
        tile_r=tile_r, chunk_r=chunk_r, num_blocks=num_blocks,
        first_masked=first_masked, full_rows=n // LANE, rem_lanes=n % LANE)

    partials = pl.pallas_call(
        kernel,
        out_shape=jax.ShapeDtypeStruct((num_shards, 3, 8, LANE), jnp.float32),
        grid_spec=pltpu.PrefetchScalarGridSpec(
            num_scalar_prefetch=0,
            grid=grid,
            in_specs=[
                pl.BlockSpec((tile_r, LANE), in_map),
                pl.BlockSpec((tile_r, LANE), in_map),
            ],
            out_specs=pl.BlockSpec(
                (1, 3, 8, LANE), lambda c, j: (c, 0, 0, 0)),
        ),
        # "parallel" on the shard axis lets Mosaic split it across TensorCores
        # on multi-core chips (v7x); it is a no-op on 1-TC v5e/v6e.
        # TODO(synk): if profiling on v7x shows both shards running on one core,
        # switch the shard axis to pltpu.CORE_PARALLEL (or pl.core_map).
        compiler_params=pltpu.CompilerParams(
            dimension_semantics=("parallel", "arbitrary"),
            vmem_limit_bytes=32 * 1024 * 1024),
    )(x2, t2)

    # Final cross-lane/cross-sublane reduction over a tiny (shards, 3, 8, 128)
    # array in the wrapper.
    sums = jnp.sum(partials, axis=(0, 2, 3))
    intersection, p_plus_t, bce_sum = sums[0], sums[1], sums[2]
    smooth = jnp.float32(smooth)
    dice_loss = 1.0 - (2.0 * intersection + smooth) / (p_plus_t + smooth)
    bce_mean = bce_sum / jnp.float32(n)
    return bce_mean + dice_loss


def _reference(inputs, targets, smooth=1.0):
    # Torch-faithful reference: sigmoid, flatten, dice + mean BCE (log clamp -100).
    p = jax.nn.sigmoid(inputs.astype(jnp.float32).reshape(-1))
    t = targets.astype(jnp.float32).reshape(-1)
    intersection = jnp.sum(p * t)
    dice = 1.0 - (2.0 * intersection + smooth) / (jnp.sum(p) + jnp.sum(t) + smooth)
    bce = jnp.mean(
        -(t * jnp.maximum(jnp.log(p), -100.0)
          + (1.0 - t) * jnp.maximum(jnp.log1p(-p), -100.0)))
    return bce + dice


if __name__ == "__main__":
    key = jax.random.PRNGKey(0)

    # Primary check: small NCHW-like logits + binary mask (fast path, 1 block).
    k1, k2 = jax.random.split(key)
    inputs = jax.random.normal(k1, (2, 4, 16, 16), dtype=jnp.float32)
    targets = (jax.random.uniform(k2, (2, 4, 16, 16)) > 0.5).astype(jnp.float32)
    loss = jax.block_until_ready(dice_bce_loss(inputs, targets, smooth=1.0))
    ref = _reference(inputs, targets, smooth=1.0)
    assert jnp.allclose(loss, ref, rtol=1e-3, atol=1e-3), (loss, ref)

    # Exercise the strip-mined multi-chunk fast path.
    k3, k4 = jax.random.split(k2)
    x_b = jax.random.normal(k3, (2, 4, 128, 128), dtype=jnp.float32)
    t_b = (jax.random.uniform(k4, (2, 4, 128, 128)) > 0.5).astype(jnp.float32)
    loss_b = jax.block_until_ready(dice_bce_loss(x_b, t_b))
    ref_b = _reference(x_b, t_b)
    assert jnp.allclose(loss_b, ref_b, rtol=1e-3, atol=1e-3), (loss_b, ref_b)

    # Exercise the masked ragged-tail path (n % 128 != 0).
    k5, k6 = jax.random.split(k4)
    x_c = jax.random.normal(k5, (2, 2, 15, 17), dtype=jnp.float32)
    t_c = (jax.random.uniform(k6, (2, 2, 15, 17)) > 0.5).astype(jnp.float32)
    loss_c = jax.block_until_ready(dice_bce_loss(x_c, t_c))
    ref_c = _reference(x_c, t_c)
    assert jnp.allclose(loss_c, ref_c, rtol=1e-3, atol=1e-3), (loss_c, ref_c)

    print("KERNEL_OK")
</pallas_src>

<mosaic_0001>
module attributes {stable_mosaic.version = 11 : i64} {
  func.func @_dice_bce_kernel(%arg0: i32, %arg1: i32, %arg2: memref<16x128xf32, #tpu.memory_space<vmem>>, %arg3: memref<16x128xf32, #tpu.memory_space<vmem>>, %arg4: memref<1x3x8x128xf32, #tpu.memory_space<vmem>>) attributes {dimension_semantics = [#tpu.dimension_semantics<parallel>, #tpu.dimension_semantics<arbitrary>], iteration_bounds = array<i64: 1, 1>, scalar_prefetch = 0 : i64, scratch_operands = 0 : i64, tpu.core_type = #tpu.core_type<tc>, window_params = [{transform_indices = @transform_0, window_bounds = array<i64: 16, 128>}, {transform_indices = @transform_1, window_bounds = array<i64: 16, 128>}, {transform_indices = @transform_2, window_bounds = array<i64: 1, 3, 8, 128>}]} {
    %c1_i32 = arith.constant 1 : i32
    %0 = arith.muli %arg0, %c1_i32 : i32
    %1 = arith.addi %0, %arg1 : i32
    %c0_i32 = arith.constant 0 : i32
    %2 = arith.cmpi eq, %arg1, %c0_i32 : i32
    %3 = arith.extui %2 : i1 to i32
    %c0_i32_0 = arith.constant 0 : i32
    %4 = arith.cmpi ne, %3, %c0_i32_0 : i32
    scf.if %4 {
      %cst = arith.constant 0.000000e+00 : f32
      %8 = vector.broadcast %cst : f32 to vector<1x3x8x128xf32>
      %c0 = arith.constant 0 : index
      %c0_3 = arith.constant 0 : index
      %c0_4 = arith.constant 0 : index
      %c0_5 = arith.constant 0 : index
      %9 = vector.load %arg4[%c0, %c0_3, %c0_4, %c0_5] : memref<1x3x8x128xf32, #tpu.memory_space<vmem>>, vector<1x3x8x128xf32>
      tpu.vector_store %arg4[%c0, %c0_3, %c0_4, %c0_5], %8 {strides = array<i32>} : memref<1x3x8x128xf32, #tpu.memory_space<vmem>>, vector<1x3x8x128xf32>,
    } else {
    }
    %c1_i32_1 = arith.constant 1 : i32
    %5 = arith.cmpi slt, %1, %c1_i32_1 : i32
    %6 = arith.extui %5 : i1 to i32
    %c0_i32_2 = arith.constant 0 : i32
    %7 = arith.cmpi ne, %6, %c0_i32_2 : i32
    scf.if %7 {
      %c0 = arith.constant 0 : index
      %c0_3 = arith.constant 0 : index
      %8 = vector.load %arg2[%c0, %c0_3] : memref<16x128xf32, #tpu.memory_space<vmem>>, vector<16x128xf32>
      %c0_4 = arith.constant 0 : index
      %c0_5 = arith.constant 0 : index
      %9 = vector.load %arg3[%c0_4, %c0_5] : memref<16x128xf32, #tpu.memory_space<vmem>>, vector<16x128xf32>
      %10 = math.absf %8 : vector<16x128xf32>
      %cst = arith.constant 0.000000e+00 : f32
      %11 = vector.broadcast %cst : f32 to vector<16x128xf32>
      %12 = arith.subf %11, %10 : vector<16x128xf32>
      %13 = math.exp %12 : vector<16x128xf32>
      %cst_6 = arith.constant 1.000000e+00 : f32
      %14 = vector.broadcast %cst_6 : f32 to vector<16x128xf32>
      %15 = arith.addf %14, %13 : vector<16x128xf32>
      %16 = tpu.reciprocal %15 {approx = true} : vector<16x128xf32> -> vector<16x128xf32>
      %cst_7 = arith.constant 0.000000e+00 : f32
      %17 = vector.broadcast %cst_7 : f32 to vector<16x128xf32>
      %18 = arith.cmpf oge, %8, %17 : vector<16x128xf32>
      %19 = arith.mulf %13, %16 : vector<16x128xf32>
      %20 = arith.select %18, %16, %19 : vector<16x128xi1>, vector<16x128xf32>
      %21 = math.log1p %13 : vector<16x128xf32>
      %cst_8 = arith.constant 0.000000e+00 : f32
      %22 = vector.broadcast %cst_8 : f32 to vector<16x128xf32>
      %23 = arith.maximumf %8, %22 : vector<16x128xf32>
      %24 = arith.mulf %8, %9 : vector<16x128xf32>
      %25 = arith.subf %23, %24 : vector<16x128xf32>
      %26 = arith.addf %25, %21 : vector<16x128xf32>
      %cst_9 = arith.constant 1.000000e+02 : f32
      %27 = vector.broadcast %cst_9 : f32 to vector<16x128xf32>
      %28 = arith.minimumf %26, %27 : vector<16x128xf32>
      %29 = arith.mulf %20, %9 : vector<16x128xf32>
      %30 = arith.addf %20, %9 : vector<16x128xf32>
      %c0_10 = arith.constant 0 : index
      %c0_11 = arith.constant 0 : index
      %c0_12 = arith.constant 0 : index
      %c0_13 = arith.constant 0 : index
      %31 = vector.load %arg4[%c0_10, %c0_11, %c0_12, %c0_13] : memref<1x3x8x128xf32, #tpu.memory_space<vmem>>, vector<1x1x8x128xf32>
      %32 = vector.shape_cast %31 : vector<1x1x8x128xf32> to vector<8x128xf32>
      %33 = vector.shape_cast %29 : vector<16x128xf32> to vector<2x8x128xf32>
      %cst_14 = arith.constant dense<0.000000e+00> : vector<8x128xf32>
      %34 = vector.multi_reduction <add>, %33, %cst_14 [0] : vector<2x8x128xf32> to vector<8x128xf32>
      %35 = arith.addf %32, %34 : vector<8x128xf32>
      %c0_15 = arith.constant 0 : index
      %c0_16 = arith.constant 0 : index
      %c0_17 = arith.constant 0 : index
      %c0_18 = arith.constant 0 : index
      %36 = vector.load %arg4[%c0_15, %c0_16, %c0_17, %c0_18] : memref<1x3x8x128xf32, #tpu.memory_space<vmem>>, vector<1x1x8x128xf32>
      %37 = vector.shape_cast %36 : vector<1x1x8x128xf32> to vector<8x128xf32>
      %38 = vector.shape_cast %35 : vector<8x128xf32> to vector<1x1x8x128xf32>
      tpu.vector_store %arg4[%c0_15, %c0_16, %c0_17, %c0_18], %38 {strides = array<i32>} : memref<1x3x8x128xf32, #tpu.memory_space<vmem>>, vector<1x1x8x128xf32>,
      %c0_19 = arith.constant 0 : index
      %c1 = arith.constant 1 : index
      %c0_20 = arith.constant 0 : index
      %c0_21 = arith.constant 0 : index
      %39 = vector.load %arg4[%c0_19, %c1, %c0_20, %c0_21] : memref<1x3x8x128xf32, #tpu.memory_space<vmem>>, vector<1x1x8x128xf32>
      %40 = vector.shape_cast %39 : vector<1x1x8x128xf32> to vector<8x128xf32>
      %41 = vector.shape_cast %30 : vector<16x128xf32> to vector<2x8x128xf32>
      %cst_22 = arith.constant dense<0.000000e+00> : vector<8x128xf32>
      %42 = vector.multi_reduction <add>, %41, %cst_22 [0] : vector<2x8x128xf32> to vector<8x128xf32>
      %43 = arith.addf %40, %42 : vector<8x128xf32>
      %c0_23 = arith.constant 0 : index
      %c1_24 = arith.constant 1 : index
      %c0_25 = arith.constant 0 : index
      %c0_26 = arith.constant 0 : index
      %44 = vector.load %arg4[%c0_23, %c1_24, %c0_25, %c0_26] : memref<1x3x8x128xf32, #tpu.memory_space<vmem>>, vector<1x1x8x128xf32>
      %45 = vector.shape_cast %44 : vector<1x1x8x128xf32> to vector<8x128xf32>
      %46 = vector.shape_cast %43 : vector<8x128xf32> to vector<1x1x8x128xf32>
      tpu.vector_store %arg4[%c0_23, %c1_24, %c0_25, %c0_26], %46 {strides = array<i32>} : memref<1x3x8x128xf32, #tpu.memory_space<vmem>>, vector<1x1x8x128xf32>,
      %c0_27 = arith.constant 0 : index
      %c2 = arith.constant 2 : index
      %c0_28 = arith.constant 0 : index
      %c0_29 = arith.constant 0 : index
      %47 = vector.load %arg4[%c0_27, %c2, %c0_28, %c0_29] : memref<1x3x8x128xf32, #tpu.memory_space<vmem>>, vector<1x1x8x128xf32>
      %48 = vector.shape_cast %47 : vector<1x1x8x128xf32> to vector<8x128xf32>
      %49 = vector.shape_cast %28 : vector<16x128xf32> to vector<2x8x128xf32>
      %cst_30 = arith.constant dense<0.000000e+00> : vector<8x128xf32>
      %50 = vector.multi_reduction <add>, %49, %cst_30 [0] : vector<2x8x128xf32> to vector<8x128xf32>
      %51 = arith.addf %48, %50 : vector<8x128xf32>
      %c0_31 = arith.constant 0 : index
      %c2_32 = arith.constant 2 : index
      %c0_33 = arith.constant 0 : index
      %c0_34 = arith.constant 0 : index
      %52 = vector.load %arg4[%c0_31, %c2_32, %c0_33, %c0_34] : memref<1x3x8x128xf32, #tpu.memory_space<vmem>>, vector<1x1x8x128xf32>
      %53 = vector.shape_cast %52 : vector<1x1x8x128xf32> to vector<8x128xf32>
      %54 = vector.shape_cast %51 : vector<8x128xf32> to vector<1x1x8x128xf32>
      tpu.vector_store %arg4[%c0_31, %c2_32, %c0_33, %c0_34], %54 {strides = array<i32>} : memref<1x3x8x128xf32, #tpu.memory_space<vmem>>, vector<1x1x8x128xf32>,
    } else {
    }
    return
  }
  func.func @transform_0(%arg0: i32, %arg1: i32) -> (i32, i32) {
    %c1_i32 = arith.constant 1 : i32
    %0 = arith.muli %arg0, %c1_i32 : i32
    %1 = arith.addi %0, %arg1 : i32
    %c0_i32 = arith.constant 0 : i32
    %2 = arith.minsi %1, %c0_i32 : i32
    %c0_i32_0 = arith.constant 0 : i32
    %c0_i32_1 = arith.constant 0 : i32
    return %2, %c0_i32_0 : i32, i32
  }
  func.func @transform_1(%arg0: i32, %arg1: i32) -> (i32, i32) {
    %c1_i32 = arith.constant 1 : i32
    %0 = arith.muli %arg0, %c1_i32 : i32
    %1 = arith.addi %0, %arg1 : i32
    %c0_i32 = arith.constant 0 : i32
    %2 = arith.minsi %1, %c0_i32 : i32
    %c0_i32_0 = arith.constant 0 : i32
    %c0_i32_1 = arith.constant 0 : i32
    return %2, %c0_i32_0 : i32, i32
  }
  func.func @transform_2(%arg0: i32, %arg1: i32) -> (i32, i32, i32, i32) {
    %c0_i32 = arith.constant 0 : i32
    %c0_i32_0 = arith.constant 0 : i32
    %c0_i32_1 = arith.constant 0 : i32
    %c0_i32_2 = arith.constant 0 : i32
    return %arg0, %c0_i32, %c0_i32_0, %c0_i32_1 : i32, i32, i32, i32
  }
}

</mosaic_0001>

<llo_original>
// kernel: tpu_custom_call.1
$region0: #{tpu_custom_call.1}
  #allocation0 [shape = 'u32[]', space=smem, size = 0x4, offset = 0x4, fixed_abs, tag = 'smem constant byte address 0x4 - core index']
  #allocation1 [shape = 'u32[144,128]{1,0:T(1,128)}', space=vmem, size = 0x12000, scoped, tag = 'internal scratch']
  %s0 = inlined_call_operand.hbm [shape: f32[16,128], index: 0, kind: input, shape index: {}]
  %s1 = inlined_call_operand.hbm [shape: f32[16,128], index: 1, kind: input, shape index: {}]
  %s2 = inlined_call_operand.hbm [shape: f32[1,3,8,128], index: 2, kind: output, shape index: {}]
  %s3 = sld [smem:[#allocation0]]
  $region34: #{tpu_custom_call.1} parent=0
    _
  %s5 = ssub.s32 1, %s3
  %s6 = scalar_select 0, %s5, %s3
  $region1: #{tpu_custom_call.1} parent=0
    #allocation2 [shape = 'u8[8192]{0}', space=vmem, size = 0x2000, scoped, tag = 'input window, operand 0, single buffered']
    #allocation3 [shape = 's32[1]{0}', space=sflag, size = 0x4, scoped, tag = 'scoped memory for tpu_custom_call.1']
    #allocation4 [shape = 's32[1]{0}', space=sflag, size = 0x4, scoped, tag = 'scoped memory for tpu_custom_call.1']
    #allocation5 [shape = 'u8[8192]{0}', space=vmem, size = 0x2000, scoped, tag = 'input window, operand 1, single buffered']
    #allocation6 [shape = 's32[1]{0}', space=sflag, size = 0x4, scoped, tag = 'scoped memory for tpu_custom_call.1']
    #allocation7 [shape = 'u8[12288]{0}', space=vmem, size = 0x3000, scoped, tag = 'output window, operand 0, single buffered']
    %7 = vsyncpa [#allocation3], 0
    %8 = vsyncpa [#allocation6], 0
    %9 = vsyncpa [#allocation4], 0
    // Predicated region
    $region2: #{tpu_custom_call.1} parent=1 // pred_check
      _
    $region3: #{tpu_custom_call.1} parent=1 // pred_check_branch
      %11 = sbr.rel (0) target = $region5
    $region4: #{tpu_custom_call.1} parent=1 // pred_region
      %s12 = sadd.s32 0, 0
      %p13 = scmp.lt.s32.totalorder %s12, 0
      %s14 = scalar_select %p13, %s12, 0
      %s15 = smul.u32 2, %s14
      %s17 = ssub.s32 256, 256
      %18 = vsyncadd [#allocation3], %s17
      %s19 = smul.addr %s15, 128
      %s20 = scalar_lea.hbm %s0, %s19
      %s21 = sshll.u32 [#allocation2], 4
      %s22 = int_to_ptr.vmem [resolvable:$true] %s21
      %27 = dma.hbm_to_vmem [thread:$0]  %s20, 256, %s22, [#allocation3], 128, 128, 8
    $region5: #{tpu_custom_call.1} parent=1 // pred_fallthru
      _
    // Predicated region
    $region6: #{tpu_custom_call.1} parent=1 // pred_check
      _
    $region7: #{tpu_custom_call.1} parent=1 // pred_check_branch
      %29 = sbr.rel (0) target = $region9
    $region8: #{tpu_custom_call.1} parent=1 // pred_region
      %s30 = sadd.s32 0, 0
      %p31 = scmp.lt.s32.totalorder %s30, 0
      %s32 = scalar_select %p31, %s30, 0
      %s33 = smul.u32 2, %s32
      %s35 = ssub.s32 256, 256
      %36 = vsyncadd [#allocation6], %s35
      %s37 = smul.addr %s33, 128
      %s38 = scalar_lea.hbm %s1, %s37
      %s39 = sshll.u32 [#allocation5], 4
      %s40 = int_to_ptr.vmem [resolvable:$true] %s39
      %45 = dma.hbm_to_vmem [thread:$0]  %s38, 256, %s40, [#allocation6], 128, 128, 8
    $region9: #{tpu_custom_call.1} parent=1 // pred_fallthru
      _
    // Predicated region
    $region10: #{tpu_custom_call.1} parent=1 // pred_check
      _
    $region11: #{tpu_custom_call.1} parent=1 // pred_check_branch
      %47 = sbr.rel (0) target = $region13
    $region12: #{tpu_custom_call.1} parent=1 // pred_region
      %48 = dma.done [#allocation3], 256
    $region13: #{tpu_custom_call.1} parent=1 // pred_fallthru
      _
    // Predicated region
    $region14: #{tpu_custom_call.1} parent=1 // pred_check
      _
    $region15: #{tpu_custom_call.1} parent=1 // pred_check_branch
      %50 = sbr.rel (0) target = $region17
    $region16: #{tpu_custom_call.1} parent=1 // pred_region
      %51 = dma.done [#allocation6], 256
    $region17: #{tpu_custom_call.1} parent=1 // pred_fallthru
      _
    %s52 = sadd.s32 0, 0
    %p53 = scmp.lt.s32.totalorder %s52, 0
    %s54 = scalar_select %p53, %s52, 0
    %s55 = smul.u32 2, %s54
    %s56 = sadd.s32 0, 0
    %p57 = scmp.lt.s32.totalorder %s56, 0
    %s58 = scalar_select %p57, %s56, 0
    %s59 = smul.u32 2, %s58
    %s60 = sadd.s32 0, 0
    %p61 = scmp.eq.s32.totalorder 0, 0
    // Predicated region
    $region18: #{tpu_custom_call.1} parent=1 // pred_check
      %p62 = pneg %p61
    $region19: #{tpu_custom_call.1} parent=1 // pred_check_branch
      %64 = sbr.rel (%p62) target = $region21
    $region20: #{tpu_custom_call.1} parent=1 // pred_region
      %65 = vst [vmem:[#allocation7] sm:$0xff] 0.0
      %66 = vst [vmem:[#allocation7 + $0x8] sm:$0xff] 0.0
      %67 = vst [vmem:[#allocation7 + $0x10] sm:$0xff] 0.0
    $region21: #{tpu_custom_call.1} parent=1 // pred_fallthru
      _
    %p68 = scmp.lt.s32.totalorder %s60, 1
    // Predicated region
    $region22: #{tpu_custom_call.1} parent=1 // pred_check
      %p69 = pneg %p68
    $region23: #{tpu_custom_call.1} parent=1 // pred_check_branch
      %71 = sbr.rel (%p69) target = $region25
    $region24: #{tpu_custom_call.1} parent=1 // pred_region
      %v72 = vld [vmem:[#allocation2] sm:$0xff]
      %v73 = vld [vmem:[#allocation2 + $0x8] sm:$0xff]
      %v74 = vld [vmem:[#allocation5] sm:$0xff]
      %v75 = vld [vmem:[#allocation5 + $0x8] sm:$0xff]
      %v76 = vand.u32 2147483647, %v72
      %v77 = vand.u32 2147483647, %v73
      %v78 = vsub.f32 0.0, %v76
      %v79 = vsub.f32 0.0, %v77
      %v80 = vmul.f32 %v78, 1.442695
      %v81 = vpow.pop %v80
      %v82 = vmul.f32 %v79, 1.442695
      %v83 = vpow.pop %v82
      %v84 = vadd.f32 %v81, 1.0
      %v85 = vadd.f32 %v83, 1.0
      %v86 = vrcp.pop %v84
      %v87 = vrcp.pop %v85
      %vm88 = vcmp.ge.f32.partialorder %v72, 0.0
      %vm89 = vcmp.ge.f32.partialorder %v73, 0.0
      %v90 = vmul.f32 %v81, %v86
      %v91 = vmul.f32 %v83, %v87
      %v92 = vsel %vm88, %v86, %v90
      %v93 = vsel %vm89, %v87, %v91
      %v94 = vadd.f32 %v81, 1.0
      %v95 = vlog2.pop %v94
      %v96 = vmul.f32 %v95, 0.6931472
      %v97 = vmul.f32 -0.5, %v81
      %v98 = vadd.f32 %v97, 1.0
      %v99 = vmul.f32 %v98, %v81
      %v100 = vand.u32 2147483647, %v81
      %vm101 = vcmp.lt.f32.partialorder %v100, 0.0004427343
      %v102 = vsel %vm101, %v99, %v96
      %v103 = vadd.f32 %v83, 1.0
      %v104 = vlog2.pop %v103
      %v105 = vmul.f32 %v104, 0.6931472
      %v106 = vmul.f32 -0.5, %v83
      %v107 = vadd.f32 %v106, 1.0
      %v108 = vmul.f32 %v107, %v83
      %v109 = vand.u32 2147483647, %v83
      %vm110 = vcmp.lt.f32.partialorder %v109, 0.0004427343
      %v111 = vsel %vm110, %v108, %v105
      %v112 = vmax.f32 %v72, 0.0
      %v113 = vmax.f32 %v73, 0.0
      %v114 = vmul.f32 %v72, %v74
      %v115 = vmul.f32 %v73, %v75
      %v116 = vsub.f32 %v112, %v114
      %v117 = vsub.f32 %v113, %v115
      %v118 = vadd.f32 %v116, %v102
      %v119 = vadd.f32 %v117, %v111
      %v120 = vmin.f32 %v118, 100.0
      %v121 = vmin.f32 %v119, 100.0
      %v122 = vmul.f32 %v92, %v74
      %v123 = vmul.f32 %v93, %v75
      %v124 = vadd.f32 %v92, %v74
      %v125 = vadd.f32 %v93, %v75
      %v126 = vld [vmem:[#allocation7] sm:$0xff]
      %v127 = vadd.f32 %v122, %v123
      %v128 = vadd.f32 %v126, %v127
      %129 = vst [vmem:[#allocation7] sm:$0xff] %v128
      %s130 = scalar_lea.vmem [#allocation7], 8
      %v131 = vld [vmem:[%s130] sm:$0xff]
      %v132 = vadd.f32 %v124, %v125
      %v133 = vadd.f32 %v131, %v132
      %134 = vst [vmem:[%s130] sm:$0xff] %v133
      %s135 = scalar_lea.vmem [#allocation7], 16
      %v136 = vld [vmem:[%s135] sm:$0xff]
      %v137 = vadd.f32 %v120, %v121
      %v138 = vadd.f32 %v136, %v137
      %139 = vst [vmem:[%s135] sm:$0xff] %v138
    $region25: #{tpu_custom_call.1} parent=1 // pred_fallthru
      _
    // Predicated region
    $region26: #{tpu_custom_call.1} parent=1 // pred_check
      _
    $region27: #{tpu_custom_call.1} parent=1 // pred_check_branch
      %141 = sbr.rel (0) target = $region29
    $region28: #{tpu_custom_call.1} parent=1 // pred_region
      %s143 = ssub.s32 384, 384
      %144 = vsyncadd [#allocation4], %s143
      %s145 = sshll.u32 [#allocation7], 4
      %s146 = int_to_ptr.vmem [resolvable:$true] %s145
      %151 = dma.vmem_to_hbm [thread:$0]  %s146, 384, %s2, [#allocation4], 128, 128, 8
    $region29: #{tpu_custom_call.1} parent=1 // pred_fallthru
      _
    // Predicated region
    $region30: #{tpu_custom_call.1} parent=1 // pred_check
      _
    $region31: #{tpu_custom_call.1} parent=1 // pred_check_branch
      %153 = sbr.rel (0) target = $region33
    $region32: #{tpu_custom_call.1} parent=1 // pred_region
      %154 = dma.done [#allocation4], 384
    $region33: #{tpu_custom_call.1} parent=1 // pred_fallthru
      _
    %155 = vsyncpa [#allocation3], 1
    %156 = vsyncpa [#allocation6], 1
    %157 = vsyncpa [#allocation4], 1

</llo_original>
